<compile_context>
chip_gen: v7x
topology: tpu7x:2x2x1
jax: 0.10.0
libtpu: 0.0.40
codegen_flags: <defaults>
</compile_context>

<pallas_src>
import jax
import jax.numpy as jnp
from jax.experimental import pallas as pl
from jax.experimental.pallas import tpu as pltpu


def _copy_block_kernel(x_ref, o_ref):
    # Pure data movement: one large lane-dense block per grid step.
    o_ref[...] = x_ref[...]


def _pick_slab(total, itemsize):
    """View a flat buffer of `total` elements as (rows, cols) with cols a
    multiple of 128 and rows a multiple of the dtype's sublane tile."""
    sublane = 8 * max(1, 4 // itemsize)  # 8 for f32, 16 for bf16, 32 for int8
    for cols in (2048, 1024, 512, 256, 128):
        if total % cols:
            continue
        rows = total // cols
        if rows % sublane == 0:
            return rows, cols, sublane
    return None


def stgcn_forward(x):
    """Pallas implementation of StGcn.forward.

    Returns (o, proto): o is the (always empty) python list, proto is the
    batch-flattened input, matching the PyTorch module.
    """
    n = x.shape[0]
    d = 1
    for s in x.shape[1:]:
        d *= s

    # Row-major flatten — identical element order to torch's Flatten(start_dim=1).
    x_flat = x.reshape(n, d)

    total = n * d
    itemsize = jnp.dtype(x.dtype).itemsize
    slab = _pick_slab(total, itemsize)
    if slab is None:
        # No (sublane,128)-aligned slab view exists; the flatten is a
        # metadata-only reshape anyway, so return it directly (fastest path).
        return [], x_flat

    rows, cols, sublane = slab

    # ~2 MiB per block: with input+output double-buffering this stays well
    # under the scoped-VMEM default on v5e/v6e/v7x while amortizing the
    # ~0.35 us per-grid-step overhead.
    target_rows = (2 * 1024 * 1024) // (cols * itemsize)
    block_rows = max(sublane, (target_rows // sublane) * sublane)
    block_rows = min(block_rows, rows)
    grid = (pl.cdiv(rows, block_rows),)

    slab_in = x_flat.reshape(rows, cols)  # metadata-only re-view

    slab_out = pl.pallas_call(
        _copy_block_kernel,
        out_shape=jax.ShapeDtypeStruct((rows, cols), x.dtype),
        grid_spec=pltpu.PrefetchScalarGridSpec(
            num_scalar_prefetch=0,
            grid=grid,
            in_specs=[pl.BlockSpec((block_rows, cols), lambda i: (i, 0))],
            out_specs=pl.BlockSpec((block_rows, cols), lambda i: (i, 0)),
        ),
        compiler_params=pltpu.CompilerParams(
            dimension_semantics=("parallel",)),
    )(slab_in)

    o = []  # forward() builds an empty list and returns it untouched
    return o, slab_out.reshape(n, d)


if __name__ == "__main__":
    key = jax.random.PRNGKey(0)
    # Small NCHW input: batch=2, channels=4, H=W=16  (C*H*W = 1024 features).
    x = jax.random.normal(key, (2, 4, 16, 16), dtype=jnp.float32)

    o, proto = stgcn_forward(x)
    proto = jax.block_until_ready(proto)

    # Shape / semantics checks against the reference flatten.
    assert isinstance(o, list) and o == []
    assert proto.shape == (2, 4 * 16 * 16)
    assert proto.dtype == x.dtype
    assert bool(jnp.all(proto == x.reshape(2, -1)))

    print("KERNEL_OK")
</pallas_src>

<mosaic_0001>
module attributes {stable_mosaic.version = 11 : i64} {
  func.func @_copy_block_kernel(%arg0: i32, %arg1: memref<8x256xf32, #tpu.memory_space<vmem>>, %arg2: memref<8x256xf32, #tpu.memory_space<vmem>>) attributes {dimension_semantics = [#tpu.dimension_semantics<parallel>], iteration_bounds = array<i64: 1>, scalar_prefetch = 0 : i64, scratch_operands = 0 : i64, tpu.core_type = #tpu.core_type<tc>, window_params = [{transform_indices = @transform_0, window_bounds = array<i64: 8, 256>}, {transform_indices = @transform_1, window_bounds = array<i64: 8, 256>}]} {
    %c0 = arith.constant 0 : index
    %c0_0 = arith.constant 0 : index
    %0 = vector.load %arg1[%c0, %c0_0] : memref<8x256xf32, #tpu.memory_space<vmem>>, vector<8x256xf32>
    %c0_1 = arith.constant 0 : index
    %c0_2 = arith.constant 0 : index
    %1 = vector.load %arg2[%c0_1, %c0_2] : memref<8x256xf32, #tpu.memory_space<vmem>>, vector<8x256xf32>
    tpu.vector_store %arg2[%c0_1, %c0_2], %0 {strides = array<i32>} : memref<8x256xf32, #tpu.memory_space<vmem>>, vector<8x256xf32>,
    return
  }
  func.func @transform_0(%arg0: i32) -> (i32, i32) {
    %c0_i32 = arith.constant 0 : i32
    %c0_i32_0 = arith.constant 0 : i32
    return %arg0, %c0_i32 : i32, i32
  }
  func.func @transform_1(%arg0: i32) -> (i32, i32) {
    %c0_i32 = arith.constant 0 : i32
    %c0_i32_0 = arith.constant 0 : i32
    return %arg0, %c0_i32 : i32, i32
  }
}

</mosaic_0001>

<llo_original>
// kernel: tpu_custom_call.1
$region0: #{tpu_custom_call.1}
  #allocation0 [shape = 'u32[]', space=smem, size = 0x4, offset = 0x4, fixed_abs, tag = 'smem constant byte address 0x4 - core index']
  #allocation1 [shape = 'u32[144,128]{1,0:T(1,128)}', space=vmem, size = 0x12000, scoped, tag = 'internal scratch']
  %s0 = inlined_call_operand.hbm [shape: f32[8,256], index: 0, kind: input, shape index: {}]
  %s1 = inlined_call_operand.hbm [shape: f32[8,256], index: 1, kind: output, shape index: {}]
  %s2 = sld [smem:[#allocation0]]
  $region18: #{tpu_custom_call.1} parent=0
    _
  %s4 = ssub.s32 1, %s2
  %s5 = scalar_select 0, %s4, %s2
  $region1: #{tpu_custom_call.1} parent=0
    #allocation2 [shape = 'u8[8192]{0}', space=vmem, size = 0x2000, scoped, tag = 'input window, operand 0, single buffered']
    #allocation3 [shape = 's32[1]{0}', space=sflag, size = 0x4, scoped, tag = 'scoped memory for tpu_custom_call.1']
    #allocation4 [shape = 's32[1]{0}', space=sflag, size = 0x4, scoped, tag = 'scoped memory for tpu_custom_call.1']
    #allocation5 [shape = 'u8[8192]{0}', space=vmem, size = 0x2000, scoped, tag = 'output window, operand 0, single buffered']
    %6 = vsyncpa [#allocation3], 0
    %7 = vsyncpa [#allocation4], 0
    // Predicated region
    $region2: #{tpu_custom_call.1} parent=1 // pred_check
      _
    $region3: #{tpu_custom_call.1} parent=1 // pred_check_branch
      %9 = sbr.rel (0) target = $region5
    $region4: #{tpu_custom_call.1} parent=1 // pred_region
      %s11 = ssub.s32 256, 256
      %12 = vsyncadd [#allocation3], %s11
      %s14 = sshll.u32 [#allocation2], 4
      %s15 = int_to_ptr.vmem [resolvable:$true] %s14
      %17 = dma.hbm_to_vmem [thread:$0]  %s0, 256, %s15, [#allocation3]
    $region5: #{tpu_custom_call.1} parent=1 // pred_fallthru
      _
    // Predicated region
    $region6: #{tpu_custom_call.1} parent=1 // pred_check
      _
    $region7: #{tpu_custom_call.1} parent=1 // pred_check_branch
      %19 = sbr.rel (0) target = $region9
    $region8: #{tpu_custom_call.1} parent=1 // pred_region
      %20 = dma.done [#allocation3], 256
    $region9: #{tpu_custom_call.1} parent=1 // pred_fallthru
      _
    %v21 = vld [vmem:[#allocation2] sm:$0xff]
    %v22 = vld [vmem:[#allocation2 + $0x8] sm:$0xff]
    %23 = vst [vmem:[#allocation5] sm:$0xff] %v21
    %24 = vst [vmem:[#allocation5 + $0x8] sm:$0xff] %v22
    // Predicated region
    $region10: #{tpu_custom_call.1} parent=1 // pred_check
      _
    $region11: #{tpu_custom_call.1} parent=1 // pred_check_branch
      %26 = sbr.rel (0) target = $region13
    $region12: #{tpu_custom_call.1} parent=1 // pred_region
      %s28 = ssub.s32 256, 256
      %29 = vsyncadd [#allocation4], %s28
      %s31 = sshll.u32 [#allocation5], 4
      %s32 = int_to_ptr.vmem [resolvable:$true] %s31
      %34 = dma.vmem_to_hbm [thread:$0]  %s32, 256, %s1, [#allocation4]
    $region13: #{tpu_custom_call.1} parent=1 // pred_fallthru
      _
    // Predicated region
    $region14: #{tpu_custom_call.1} parent=1 // pred_check
      _
    $region15: #{tpu_custom_call.1} parent=1 // pred_check_branch
      %36 = sbr.rel (0) target = $region17
    $region16: #{tpu_custom_call.1} parent=1 // pred_region
      %37 = dma.done [#allocation4], 256
    $region17: #{tpu_custom_call.1} parent=1 // pred_fallthru
      _
    %38 = vsyncpa [#allocation3], 1
    %39 = vsyncpa [#allocation4], 1

</llo_original>
